<compile_context>
chip_gen: v7x
topology: tpu7x:2x2x1
jax: 0.10.0
libtpu: 0.0.40
codegen_flags: <defaults>
</compile_context>

<pallas_src>
import jax
import jax.numpy as jnp
from jax.experimental import pallas as pl
from jax.experimental.pallas import tpu as pltpu

_LANE = 128


def _round_up(x, m):
    return (x + m - 1) // m * m


def _decoder_kernel(ids_ref, h0_ref, c0_ref, enc_ref, emb_ref,
                    w_in_ref, w_ao_ctx_ref, w_ao_h_ref, b_ao_ref,
                    w_ih_e_ref, w_ih_a_ref, w_hh_ref, b_g_ref,
                    w_out_ref, b_out_ref,
                    logits_ref, hout_ref, cout_ref):
    f32 = jnp.float32
    B, H = h0_ref.shape
    V = emb_ref.shape[0]
    GP = b_g_ref.shape[-1] // 4            # per-gate lane stride (vreg aligned, >= H)

    # --- embedding lookup: SMEM token ids -> dynamic row reads of the VMEM table ---
    rows = []
    for b in range(B):                     # B is tiny and static; unrolled at trace time
        idx = jnp.clip(ids_ref[b], 0, V - 1)   # OOB clamp (nn.Embedding assumes valid ids)
        rows.append(emb_ref[idx])              # (1, E) — leading-dim dynamic index
    embeddings = jnp.concatenate(rows, axis=0)  # (B, E)

    h0 = h0_ref[...]                        # (B, H)
    c0 = c0_ref[...]                        # (B, H)
    enc = enc_ref[...]                      # (B, S, 2H)

    # --- attention (query = cell state; y_len == 1 in the PyTorch module) ---
    # scores[b, s] = <enc[b, s, :], c0[b] @ W_in>   (fc_in folded onto the query)
    q = jnp.dot(c0, w_in_ref[...], preferred_element_type=f32)       # (B, 2H)
    scores = jnp.sum(q[:, None, :] * enc, axis=-1)                   # (B, S)  VPU mul + XLU reduce
    scores = scores - jnp.max(scores, axis=-1, keepdims=True)
    e = jnp.exp(scores)
    p = e * pl.reciprocal(jnp.sum(e, axis=-1, keepdims=True), approx=True)   # softmax(dim=2)
    wctx = jnp.sum(p[:, :, None] * enc, axis=1)                      # (B, 2H)

    # fc_out applied to cat(wctx, c0) without a lane-axis concat (weights pre-split)
    att_out = jnp.tanh(
        jnp.dot(wctx, w_ao_ctx_ref[...], preferred_element_type=f32)
        + jnp.dot(c0, w_ao_h_ref[...], preferred_element_type=f32)
        + b_ao_ref[...])                                             # (B, H)

    # --- one LSTM step, PyTorch gate order (i, f, g, o); gate k lives at lanes [k*GP, k*GP+H) ---
    gates = (jnp.dot(embeddings, w_ih_e_ref[...], preferred_element_type=f32)
             + jnp.dot(att_out, w_ih_a_ref[...], preferred_element_type=f32)
             + jnp.dot(h0, w_hh_ref[...], preferred_element_type=f32)
             + b_g_ref[...])                                         # (B, 4*GP)
    i_g = jax.nn.sigmoid(gates[:, 0 * GP:0 * GP + H])
    f_g = jax.nn.sigmoid(gates[:, 1 * GP:1 * GP + H])
    g_g = jnp.tanh(gates[:, 2 * GP:2 * GP + H])
    o_g = jax.nn.sigmoid(gates[:, 3 * GP:3 * GP + H])
    c_new = f_g * c0 + i_g * g_g
    h_new = o_g * jnp.tanh(c_new)

    # --- output projection (vocab padded to a lane-dense multiple of 128) ---
    logits_ref[...] = (jnp.dot(h_new, w_out_ref[...], preferred_element_type=f32)
                       + b_out_ref[...])
    hout_ref[...] = h_new
    cout_ref[...] = c_new


def init_raw_params(key, vocab_size, embed_size, hidden_size):
    """Deterministic synthetic parameters in the original PyTorch layouts."""
    V, E, H = vocab_size, embed_size, hidden_size
    ks = jax.random.split(key, 10)

    def nrm(k, shape, scale=0.1):
        return (scale * jax.random.normal(k, shape)).astype(jnp.float32)

    return {
        'emb':   nrm(ks[0], (V, E)),           # nn.Embedding(vocab, embed)
        'w_in':  nrm(ks[1], (H, 2 * H)),       # Atten.fc_in.weight (no bias)
        'w_ao':  nrm(ks[2], (H, 3 * H)),       # Atten.fc_out.weight
        'b_ao':  nrm(ks[3], (H,)),             # Atten.fc_out.bias
        'w_ih':  nrm(ks[4], (4 * H, E + H)),   # lstm.weight_ih_l0 (gate order i,f,g,o)
        'w_hh':  nrm(ks[5], (4 * H, H)),       # lstm.weight_hh_l0
        'b_ih':  nrm(ks[6], (4 * H,)),
        'b_hh':  nrm(ks[7], (4 * H,)),
        'w_out': nrm(ks[8], (V, H)),           # self.out
        'b_out': nrm(ks[9], (V,)),
    }


def prepare_kernel_params(raw):
    """Split / transpose / pad weights into the kernel-friendly layouts (done once)."""
    V, E = raw['emb'].shape
    H = raw['w_hh'].shape[-1]
    GP = _round_up(H, _LANE)      # gate-major lane stride (vreg-aligned gate slices)
    Vp = _round_up(V, _LANE)      # lane-dense logits store

    def gate_pad(w_t):            # (in, 4H) -> (in, 4*GP); gate k at lanes [k*GP, k*GP+H)
        in_dim = w_t.shape[0]
        w4 = w_t.reshape(in_dim, 4, H)
        return (jnp.zeros((in_dim, 4, GP), jnp.float32)
                .at[:, :, :H].set(w4).reshape(in_dim, 4 * GP))

    w_ih_t = raw['w_ih'].T                                  # (E+H, 4H)
    b_g = (raw['b_ih'] + raw['b_hh']).reshape(1, 4, H)
    b_gates = (jnp.zeros((1, 4, GP), jnp.float32)
               .at[:, :, :H].set(b_g).reshape(1, 4 * GP))

    w_ao_t = raw['w_ao'].T                                  # (3H, H)
    w_out_t = jnp.zeros((H, Vp), jnp.float32).at[:, :V].set(raw['w_out'].T)
    b_out = jnp.zeros((1, Vp), jnp.float32).at[:, :V].set(raw['b_out'][None, :])

    return {
        # (V, 1, E): vocab on the leading (untiled) dim -> cheap dynamic row gather.
        # TODO(synk): for a production vocab keep this table in HBM and DMA-gather rows.
        'emb': raw['emb'][:, None, :],
        'w_in': raw['w_in'],                 # (H, 2H): q = c0 @ W_in
        'w_ao_ctx': w_ao_t[:2 * H],          # (2H, H) — multiplies wctx
        'w_ao_h': w_ao_t[2 * H:],            # (H, H)  — multiplies c0
        'b_ao': raw['b_ao'][None, :],        # (1, H)
        'w_ih_e': gate_pad(w_ih_t[:E]),      # (E, 4*GP)
        'w_ih_a': gate_pad(w_ih_t[E:]),      # (H, 4*GP)
        'w_hh': gate_pad(raw['w_hh'].T),     # (H, 4*GP)
        'b_gates': b_gates,                  # (1, 4*GP)
        'w_out_t': w_out_t,                  # (H, Vp)
        'b_out': b_out,                      # (1, Vp)
    }


@jax.jit
def decoder_forward(kparams, inputs, dec_hidden, enc_outputs):
    """inputs: (B, 1) int32; dec_hidden: (h, c) each (1, B, H); enc_outputs: (B, S, 2H).
    Returns (logits (B, V), (h1, c1) each (1, B, H))."""
    h_all, c_all = dec_hidden
    h0 = h_all[0]                            # num_layers == 1
    c0 = c_all[0]
    B = inputs.shape[0]
    H = h0.shape[-1]
    V = kparams['emb'].shape[0]
    Vp = kparams['w_out_t'].shape[-1]

    ids = inputs.reshape(B).astype(jnp.int32)

    vmem = pl.BlockSpec(memory_space=pltpu.MemorySpace.VMEM)
    smem = pl.BlockSpec(memory_space=pltpu.MemorySpace.SMEM)

    args = (ids, h0, c0, enc_outputs,
            kparams['emb'], kparams['w_in'],
            kparams['w_ao_ctx'], kparams['w_ao_h'], kparams['b_ao'],
            kparams['w_ih_e'], kparams['w_ih_a'], kparams['w_hh'], kparams['b_gates'],
            kparams['w_out_t'], kparams['b_out'])

    out_shapes = (jax.ShapeDtypeStruct((B, Vp), jnp.float32),
                  jax.ShapeDtypeStruct((B, H), jnp.float32),
                  jax.ShapeDtypeStruct((B, H), jnp.float32))

    logits_p, h1, c1 = pl.pallas_call(
        _decoder_kernel,
        out_shape=out_shapes,
        in_specs=[smem] + [vmem] * (len(args) - 1),
        out_specs=(vmem, vmem, vmem),
        # Recurrent state updated in place: h0 -> h1, c0 -> c1.
        input_output_aliases={1: 1, 2: 2},
    )(*args)

    return logits_p[:, :V], (h1[None], c1[None])


def reference_forward(raw, inputs, dec_hidden, enc_outputs):
    """Pure-JAX reference with the PyTorch module's semantics (for validation)."""
    h0 = dec_hidden[0][0]
    c0 = dec_hidden[1][0]
    H = h0.shape[-1]
    emb = raw['emb'][inputs[:, 0]]                                   # (B, E)
    ctx_in = jnp.einsum('bse,he->bsh', enc_outputs, raw['w_in'])     # fc_in
    scores = jnp.einsum('bh,bsh->bs', c0, ctx_in)
    p = jax.nn.softmax(scores, axis=-1)
    wctx = jnp.einsum('bs,bse->be', p, enc_outputs)
    att_in = jnp.concatenate([wctx, c0], -1)
    att_out = jnp.tanh(att_in @ raw['w_ao'].T + raw['b_ao'])
    x = jnp.concatenate([emb, att_out], -1)
    gates = x @ raw['w_ih'].T + raw['b_ih'] + h0 @ raw['w_hh'].T + raw['b_hh']
    i, f, g, o = jnp.split(gates, 4, axis=-1)
    c1 = jax.nn.sigmoid(f) * c0 + jax.nn.sigmoid(i) * jnp.tanh(g)
    h1 = jax.nn.sigmoid(o) * jnp.tanh(c1)
    logits = h1 @ raw['w_out'].T + raw['b_out']
    return logits, h1, c1


if __name__ == "__main__":
    B, S, E, H, V = 2, 8, 16, 32, 64     # batch, src_len, embed, hidden, vocab

    key = jax.random.PRNGKey(0)
    kp, ki, kh, kc, ke = jax.random.split(key, 5)
    raw = init_raw_params(kp, V, E, H)
    kparams = prepare_kernel_params(raw)

    inputs = jax.random.randint(ki, (B, 1), 0, V, dtype=jnp.int32)   # (B, 1) token ids
    h0 = 0.1 * jax.random.normal(kh, (1, B, H), dtype=jnp.float32)   # (num_layers, B, H)
    c0 = 0.1 * jax.random.normal(kc, (1, B, H), dtype=jnp.float32)
    enc_outputs = 0.1 * jax.random.normal(ke, (B, S, 2 * H), dtype=jnp.float32)

    logits, (h1, c1) = decoder_forward(kparams, inputs, (h0, c0), enc_outputs)
    jax.block_until_ready((logits, h1, c1))

    ref_logits, ref_h1, ref_c1 = reference_forward(raw, inputs, (h0, c0), enc_outputs)
    assert logits.shape == (B, V)
    assert jnp.allclose(logits, ref_logits, atol=1e-3), "logits mismatch"
    assert jnp.allclose(h1[0], ref_h1, atol=1e-3), "h state mismatch"
    assert jnp.allclose(c1[0], ref_c1, atol=1e-3), "c state mismatch"

    print("KERNEL_OK")
</pallas_src>

<mosaic_0001>
module attributes {stable_mosaic.version = 11 : i64} {
  func.func @_decoder_kernel(%arg0: memref<2xi32, #tpu.memory_space<smem>>, %arg1: memref<2x32xf32, #tpu.memory_space<vmem>>, %arg2: memref<2x32xf32, #tpu.memory_space<vmem>>, %arg3: memref<2x8x64xf32, #tpu.memory_space<vmem>>, %arg4: memref<64x1x16xf32, #tpu.memory_space<vmem>>, %arg5: memref<32x64xf32, #tpu.memory_space<vmem>>, %arg6: memref<64x32xf32, #tpu.memory_space<vmem>>, %arg7: memref<32x32xf32, #tpu.memory_space<vmem>>, %arg8: memref<1x32xf32, #tpu.memory_space<vmem>>, %arg9: memref<16x512xf32, #tpu.memory_space<vmem>>, %arg10: memref<32x512xf32, #tpu.memory_space<vmem>>, %arg11: memref<32x512xf32, #tpu.memory_space<vmem>>, %arg12: memref<1x512xf32, #tpu.memory_space<vmem>>, %arg13: memref<32x128xf32, #tpu.memory_space<vmem>>, %arg14: memref<1x128xf32, #tpu.memory_space<vmem>>, %arg15: memref<2x128xf32, #tpu.memory_space<vmem>>, %arg16: memref<2x32xf32, #tpu.memory_space<vmem>>, %arg17: memref<2x32xf32, #tpu.memory_space<vmem>>) attributes {dimension_semantics = [], scalar_prefetch = 0 : i64, scratch_operands = 0 : i64, tpu.core_type = #tpu.core_type<tc>} {
    %c0 = arith.constant 0 : index
    %0 = memref.load %arg0[%c0] : memref<2xi32, #tpu.memory_space<smem>>
    %c0_i32 = arith.constant 0 : i32
    %c63_i32 = arith.constant 63 : i32
    %1 = arith.maxsi %c0_i32, %0 : i32
    %2 = arith.minsi %c63_i32, %1 : i32
    %3 = arith.index_cast %2 : i32 to index
    %c0_0 = arith.constant 0 : index
    %c0_1 = arith.constant 0 : index
    %4 = vector.load %arg4[%3, %c0_0, %c0_1] : memref<64x1x16xf32, #tpu.memory_space<vmem>>, vector<1x1x16xf32>
    %5 = vector.shape_cast %4 : vector<1x1x16xf32> to vector<1x16xf32>
    %c1 = arith.constant 1 : index
    %6 = memref.load %arg0[%c1] : memref<2xi32, #tpu.memory_space<smem>>
    %c0_i32_2 = arith.constant 0 : i32
    %c63_i32_3 = arith.constant 63 : i32
    %7 = arith.maxsi %c0_i32_2, %6 : i32
    %8 = arith.minsi %c63_i32_3, %7 : i32
    %9 = arith.index_cast %8 : i32 to index
    %c0_4 = arith.constant 0 : index
    %c0_5 = arith.constant 0 : index
    %10 = vector.load %arg4[%9, %c0_4, %c0_5] : memref<64x1x16xf32, #tpu.memory_space<vmem>>, vector<1x1x16xf32>
    %11 = vector.shape_cast %10 : vector<1x1x16xf32> to vector<1x16xf32>
    %12 = tpu.concatenate %5, %11 in 0 : vector<1x16xf32>, vector<1x16xf32> -> vector<2x16xf32>
    %c0_6 = arith.constant 0 : index
    %c0_7 = arith.constant 0 : index
    %13 = vector.load %arg1[%c0_6, %c0_7] : memref<2x32xf32, #tpu.memory_space<vmem>>, vector<2x32xf32>
    %c0_8 = arith.constant 0 : index
    %c0_9 = arith.constant 0 : index
    %14 = vector.load %arg2[%c0_8, %c0_9] : memref<2x32xf32, #tpu.memory_space<vmem>>, vector<2x32xf32>
    %c0_10 = arith.constant 0 : index
    %c0_11 = arith.constant 0 : index
    %c0_12 = arith.constant 0 : index
    %15 = vector.load %arg3[%c0_10, %c0_11, %c0_12] : memref<2x8x64xf32, #tpu.memory_space<vmem>>, vector<2x8x64xf32>
    %c0_13 = arith.constant 0 : index
    %c0_14 = arith.constant 0 : index
    %16 = vector.load %arg5[%c0_13, %c0_14] : memref<32x64xf32, #tpu.memory_space<vmem>>, vector<32x64xf32>
    %cst = arith.constant dense<0.000000e+00> : vector<2x64xf32>
    %17 = tpu.matmul %14, %16, %cst {dimension_numbers = #tpu.dot_dimension_numbers<[1], [0], [0], [1], [0, 0, 1, 1], [], []>} : vector<2x32xf32>, vector<32x64xf32>, vector<2x64xf32> -> vector<2x64xf32>
    %18 = vector.shape_cast %17 : vector<2x64xf32> to vector<2x1x64xf32>
    %19 = vector.broadcast %18 : vector<2x1x64xf32> to vector<2x8x64xf32>
    %20 = arith.mulf %19, %15 : vector<2x8x64xf32>
    %cst_15 = arith.constant dense<0.000000e+00> : vector<2x8xf32>
    %21 = vector.multi_reduction <add>, %20, %cst_15 [2] : vector<2x8x64xf32> to vector<2x8xf32>
    %cst_16 = arith.constant dense<0xFF800000> : vector<2xf32>
    %22 = vector.multi_reduction <maximumf>, %21, %cst_16 [1] : vector<2x8xf32> to vector<2xf32>
    %23 = vector.shape_cast %22 : vector<2xf32> to vector<2x1xf32>
    %24 = vector.broadcast %23 : vector<2x1xf32> to vector<2x8xf32>
    %25 = arith.subf %21, %24 : vector<2x8xf32>
    %26 = math.exp %25 : vector<2x8xf32>
    %cst_17 = arith.constant dense<0.000000e+00> : vector<2xf32>
    %27 = vector.multi_reduction <add>, %26, %cst_17 [1] : vector<2x8xf32> to vector<2xf32>
    %28 = vector.shape_cast %27 : vector<2xf32> to vector<2x1xf32>
    %29 = tpu.reciprocal %28 {approx = true} : vector<2x1xf32> -> vector<2x1xf32>
    %30 = vector.broadcast %29 : vector<2x1xf32> to vector<2x8xf32>
    %31 = arith.mulf %26, %30 : vector<2x8xf32>
    %32 = vector.shape_cast %31 : vector<2x8xf32> to vector<2x8x1xf32>
    %33 = vector.broadcast %32 : vector<2x8x1xf32> to vector<2x8x64xf32>
    %34 = arith.mulf %33, %15 : vector<2x8x64xf32>
    %cst_18 = arith.constant dense<0.000000e+00> : vector<2x64xf32>
    %35 = vector.multi_reduction <add>, %34, %cst_18 [1] : vector<2x8x64xf32> to vector<2x64xf32>
    %c0_19 = arith.constant 0 : index
    %c0_20 = arith.constant 0 : index
    %36 = vector.load %arg6[%c0_19, %c0_20] : memref<64x32xf32, #tpu.memory_space<vmem>>, vector<64x32xf32>
    %cst_21 = arith.constant dense<0.000000e+00> : vector<2x32xf32>
    %37 = tpu.matmul %35, %36, %cst_21 {dimension_numbers = #tpu.dot_dimension_numbers<[1], [0], [0], [1], [0, 0, 1, 1], [], []>} : vector<2x64xf32>, vector<64x32xf32>, vector<2x32xf32> -> vector<2x32xf32>
    %c0_22 = arith.constant 0 : index
    %c0_23 = arith.constant 0 : index
    %38 = vector.load %arg7[%c0_22, %c0_23] : memref<32x32xf32, #tpu.memory_space<vmem>>, vector<32x32xf32>
    %cst_24 = arith.constant dense<0.000000e+00> : vector<2x32xf32>
    %39 = tpu.matmul %14, %38, %cst_24 {dimension_numbers = #tpu.dot_dimension_numbers<[1], [0], [0], [1], [0, 0, 1, 1], [], []>} : vector<2x32xf32>, vector<32x32xf32>, vector<2x32xf32> -> vector<2x32xf32>
    %40 = arith.addf %37, %39 : vector<2x32xf32>
    %c0_25 = arith.constant 0 : index
    %c0_26 = arith.constant 0 : index
    %41 = vector.load %arg8[%c0_25, %c0_26] : memref<1x32xf32, #tpu.memory_space<vmem>>, vector<1x32xf32>
    %42 = vector.broadcast %41 : vector<1x32xf32> to vector<2x32xf32>
    %43 = arith.addf %40, %42 : vector<2x32xf32>
    %44 = math.tanh %43 : vector<2x32xf32>
    %c0_27 = arith.constant 0 : index
    %c0_28 = arith.constant 0 : index
    %45 = vector.load %arg9[%c0_27, %c0_28] : memref<16x512xf32, #tpu.memory_space<vmem>>, vector<16x512xf32>
    %cst_29 = arith.constant dense<0.000000e+00> : vector<2x512xf32>
    %46 = tpu.matmul %12, %45, %cst_29 {dimension_numbers = #tpu.dot_dimension_numbers<[1], [0], [0], [1], [0, 0, 1, 1], [], []>} : vector<2x16xf32>, vector<16x512xf32>, vector<2x512xf32> -> vector<2x512xf32>
    %c0_30 = arith.constant 0 : index
    %c0_31 = arith.constant 0 : index
    %47 = vector.load %arg10[%c0_30, %c0_31] : memref<32x512xf32, #tpu.memory_space<vmem>>, vector<32x512xf32>
    %cst_32 = arith.constant dense<0.000000e+00> : vector<2x512xf32>
    %48 = tpu.matmul %44, %47, %cst_32 {dimension_numbers = #tpu.dot_dimension_numbers<[1], [0], [0], [1], [0, 0, 1, 1], [], []>} : vector<2x32xf32>, vector<32x512xf32>, vector<2x512xf32> -> vector<2x512xf32>
    %49 = arith.addf %46, %48 : vector<2x512xf32>
    %c0_33 = arith.constant 0 : index
    %c0_34 = arith.constant 0 : index
    %50 = vector.load %arg11[%c0_33, %c0_34] : memref<32x512xf32, #tpu.memory_space<vmem>>, vector<32x512xf32>
    %cst_35 = arith.constant dense<0.000000e+00> : vector<2x512xf32>
    %51 = tpu.matmul %13, %50, %cst_35 {dimension_numbers = #tpu.dot_dimension_numbers<[1], [0], [0], [1], [0, 0, 1, 1], [], []>} : vector<2x32xf32>, vector<32x512xf32>, vector<2x512xf32> -> vector<2x512xf32>
    %52 = arith.addf %49, %51 : vector<2x512xf32>
    %c0_36 = arith.constant 0 : index
    %c0_37 = arith.constant 0 : index
    %53 = vector.load %arg12[%c0_36, %c0_37] : memref<1x512xf32, #tpu.memory_space<vmem>>, vector<1x512xf32>
    %54 = vector.broadcast %53 : vector<1x512xf32> to vector<2x512xf32>
    %55 = arith.addf %52, %54 : vector<2x512xf32>
    %56 = vector.extract_strided_slice %55 {offsets = [0, 0], sizes = [2, 32], strides = [1, 1]} : vector<2x512xf32> to vector<2x32xf32>
    %57 = arith.negf %56 : vector<2x32xf32>
    %58 = math.exp %57 : vector<2x32xf32>
    %cst_38 = arith.constant 1.000000e+00 : f32
    %59 = vector.broadcast %cst_38 : f32 to vector<2x32xf32>
    %60 = arith.addf %59, %58 : vector<2x32xf32>
    %61 = arith.divf %59, %60 : vector<2x32xf32>
    %62 = vector.extract_strided_slice %55 {offsets = [0, 128], sizes = [2, 32], strides = [1, 1]} : vector<2x512xf32> to vector<2x32xf32>
    %63 = arith.negf %62 : vector<2x32xf32>
    %64 = math.exp %63 : vector<2x32xf32>
    %cst_39 = arith.constant 1.000000e+00 : f32
    %65 = vector.broadcast %cst_39 : f32 to vector<2x32xf32>
    %66 = arith.addf %65, %64 : vector<2x32xf32>
    %67 = arith.divf %65, %66 : vector<2x32xf32>
    %68 = vector.extract_strided_slice %55 {offsets = [0, 256], sizes = [2, 32], strides = [1, 1]} : vector<2x512xf32> to vector<2x32xf32>
    %69 = math.tanh %68 : vector<2x32xf32>
    %70 = vector.extract_strided_slice %55 {offsets = [0, 384], sizes = [2, 32], strides = [1, 1]} : vector<2x512xf32> to vector<2x32xf32>
    %71 = arith.negf %70 : vector<2x32xf32>
    %72 = math.exp %71 : vector<2x32xf32>
    %cst_40 = arith.constant 1.000000e+00 : f32
    %73 = vector.broadcast %cst_40 : f32 to vector<2x32xf32>
    %74 = arith.addf %73, %72 : vector<2x32xf32>
    %75 = arith.divf %73, %74 : vector<2x32xf32>
    %76 = arith.mulf %67, %14 : vector<2x32xf32>
    %77 = arith.mulf %61, %69 : vector<2x32xf32>
    %78 = arith.addf %76, %77 : vector<2x32xf32>
    %79 = math.tanh %78 : vector<2x32xf32>
    %80 = arith.mulf %75, %79 : vector<2x32xf32>
    %c0_41 = arith.constant 0 : index
    %c0_42 = arith.constant 0 : index
    %81 = vector.load %arg13[%c0_41, %c0_42] : memref<32x128xf32, #tpu.memory_space<vmem>>, vector<32x128xf32>
    %cst_43 = arith.constant dense<0.000000e+00> : vector<2x128xf32>
    %82 = tpu.matmul %80, %81, %cst_43 {dimension_numbers = #tpu.dot_dimension_numbers<[1], [0], [0], [1], [0, 0, 1, 1], [], []>} : vector<2x32xf32>, vector<32x128xf32>, vector<2x128xf32> -> vector<2x128xf32>
    %c0_44 = arith.constant 0 : index
    %c0_45 = arith.constant 0 : index
    %83 = vector.load %arg14[%c0_44, %c0_45] : memref<1x128xf32, #tpu.memory_space<vmem>>, vector<1x128xf32>
    %84 = vector.broadcast %83 : vector<1x128xf32> to vector<2x128xf32>
    %85 = arith.addf %82, %84 : vector<2x128xf32>
    %c0_46 = arith.constant 0 : index
    %c0_47 = arith.constant 0 : index
    %86 = vector.load %arg15[%c0_46, %c0_47] : memref<2x128xf32, #tpu.memory_space<vmem>>, vector<2x128xf32>
    tpu.vector_store %arg15[%c0_46, %c0_47], %85 {strides = array<i32>} : memref<2x128xf32, #tpu.memory_space<vmem>>, vector<2x128xf32>,
    %c0_48 = arith.constant 0 : index
    %c0_49 = arith.constant 0 : index
    %87 = vector.load %arg16[%c0_48, %c0_49] : memref<2x32xf32, #tpu.memory_space<vmem>>, vector<2x32xf32>
    tpu.vector_store %arg16[%c0_48, %c0_49], %80 {strides = array<i32>} : memref<2x32xf32, #tpu.memory_space<vmem>>, vector<2x32xf32>,
    %c0_50 = arith.constant 0 : index
    %c0_51 = arith.constant 0 : index
    %88 = vector.load %arg17[%c0_50, %c0_51] : memref<2x32xf32, #tpu.memory_space<vmem>>, vector<2x32xf32>
    tpu.vector_store %arg17[%c0_50, %c0_51], %78 {strides = array<i32>} : memref<2x32xf32, #tpu.memory_space<vmem>>, vector<2x32xf32>,
    return
  }
}

</mosaic_0001>

<llo_original>
// kernel: decoder_forward.1
$region0: #{decoder_forward.1}
  #allocation0 [shape = 'u32[]', space=smem, size = 0x4, offset = 0x4, fixed_abs, tag = 'smem constant byte address 0x4 - core index']
  #allocation1 [shape = 'u32[144,128]{1,0:T(1,128)}', space=vmem, size = 0x12000, scoped, tag = 'internal scratch']
  %s0 = inlined_call_operand.vmem [shape: s32[2], index: 0, kind: input, shape index: {}]
  %s1 = inlined_call_operand.vmem [shape: f32[2,32], index: 1, kind: input, shape index: {}, may-alias: {1,16}]
  %s2 = inlined_call_operand.vmem [shape: f32[2,32], index: 2, kind: input, shape index: {}, may-alias: {2,17}]
  %s3 = inlined_call_operand.hbm [shape: f32[2,8,64], index: 3, kind: input, shape index: {}]
  %s4 = inlined_call_operand.vmem [shape: f32[64,1,16], index: 4, kind: input, shape index: {}]
  %s5 = inlined_call_operand.hbm [shape: f32[32,64], index: 5, kind: input, shape index: {}]
  %s6 = inlined_call_operand.vmem [shape: f32[64,32], index: 6, kind: input, shape index: {}]
  %s7 = inlined_call_operand.hbm [shape: f32[32,32], index: 7, kind: input, shape index: {}]
  %s8 = inlined_call_operand.vmem [shape: f32[1,32], index: 8, kind: input, shape index: {}]
  %s9 = inlined_call_operand.vmem [shape: f32[16,512], index: 9, kind: input, shape index: {}]
  %s10 = inlined_call_operand.vmem [shape: f32[32,512], index: 10, kind: input, shape index: {}]
  %s11 = inlined_call_operand.hbm [shape: f32[32,512], index: 11, kind: input, shape index: {}]
  %s12 = inlined_call_operand.vmem [shape: f32[1,512], index: 12, kind: input, shape index: {}]
  %s13 = inlined_call_operand.hbm [shape: f32[32,128], index: 13, kind: input, shape index: {}]
  %s14 = inlined_call_operand.vmem [shape: f32[1,128], index: 14, kind: input, shape index: {}]
  %s15 = inlined_call_operand.hbm [shape: f32[2,128], index: 15, kind: output, shape index: {0}]
  %s16 = inlined_call_operand.vmem [shape: f32[2,32], index: 16, kind: output, shape index: {1}, may-alias: {1,16}]
  %s17 = inlined_call_operand.vmem [shape: f32[2,32], index: 17, kind: output, shape index: {2}, may-alias: {2,17}]
  %18 = xla_tuple %s15, %s16, %s17
  %s19 = sld [smem:[#allocation0]]
  $region110: #{decoder_forward.1} parent=0
    _
  %s21 = ssub.s32 1, %s19
  %s22 = scalar_select 0, %s21, %s19
  $region1: #{decoder_forward.1} parent=0
    #allocation2 [shape = 'u8[512]{0}', space=smem, size = 0x200, scoped, tag = 'input window, operand 0, single buffered']
    #allocation3 [shape = 's32[1]{0}', space=sflag, size = 0x4, scoped, tag = 'scoped memory for decoder_forward.1']
    #allocation4 [shape = 's32[1]{0}', space=sflag, size = 0x4, scoped, tag = 'scoped memory for decoder_forward.1']
    #allocation5 [shape = 's32[1]{0}', space=sflag, size = 0x4, scoped, tag = 'scoped memory for decoder_forward.1']
    #allocation6 [shape = 'u8[8192]{0}', space=vmem, size = 0x2000, scoped, tag = 'input window, operand 3, single buffered']
    #allocation7 [shape = 'u8[16384]{0}', space=vmem, size = 0x4000, scoped, tag = 'input window, operand 5, single buffered']
    #allocation8 [shape = 's32[1]{0}', space=sflag, size = 0x4, scoped, tag = 'scoped memory for decoder_forward.1']
    #allocation9 [shape = 'u8[16384]{0}', space=vmem, size = 0x4000, scoped, tag = 'input window, operand 7, single buffered']
    #allocation10 [shape = 'u8[65536]{0}', space=vmem, size = 0x10000, scoped, tag = 'input window, operand 11, single buffered']
    #allocation11 [shape = 's32[1]{0}', space=sflag, size = 0x4, scoped, tag = 'scoped memory for decoder_forward.1']
    #allocation12 [shape = 'u8[16384]{0}', space=vmem, size = 0x4000, scoped, tag = 'input window, operand 13, single buffered']
    #allocation13 [shape = 'u8[1024]{0}', space=vmem, size = 0x400, scoped, tag = 'output window, operand 0, single buffered']
    %23 = vsyncpa [#allocation5], 0
    %24 = vsyncpa [#allocation3], 0
    %25 = vsyncpa [#allocation8], 0
    %26 = vsyncpa [#allocation11], 0
    %27 = vsyncpa [#allocation4], 0
    // Predicated region
    $region2: #{decoder_forward.1} parent=1 // pred_check
      _
    $region3: #{decoder_forward.1} parent=1 // pred_check_branch
      %29 = sbr.rel (0) target = $region5
    $region4: #{decoder_forward.1} parent=1 // pred_region
      %s31 = ssub.s32 16, 16
      %32 = vsyncadd [#allocation5], %s31
      %s34 = sshll.u32 %s0, 4
      %s35 = int_to_ptr.vmem [resolvable:$true] %s34
      %37 = dma.vmem_to_smem %s35, 16, [#allocation2], [#allocation5]
    $region5: #{decoder_forward.1} parent=1 // pred_fallthru
      _
    // Predicated region
    $region6: #{decoder_forward.1} parent=1 // pred_check
      _
    $region7: #{decoder_forward.1} parent=1 // pred_check_branch
      %39 = sbr.rel (0) target = $region9
    $region8: #{decoder_forward.1} parent=1 // pred_region
      _
    $region9: #{decoder_forward.1} parent=1 // pred_fallthru
      _
    // Predicated region
    $region10: #{decoder_forward.1} parent=1 // pred_check
      _
    $region11: #{decoder_forward.1} parent=1 // pred_check_branch
      %41 = sbr.rel (0) target = $region13
    $region12: #{decoder_forward.1} parent=1 // pred_region
      _
    $region13: #{decoder_forward.1} parent=1 // pred_fallthru
      _
    // Predicated region
    $region14: #{decoder_forward.1} parent=1 // pred_check
      _
    $region15: #{decoder_forward.1} parent=1 // pred_check_branch
      %43 = sbr.rel (0) target = $region17
    $region16: #{decoder_forward.1} parent=1 // pred_region
      %s45 = ssub.s32 256, 256
      %46 = vsyncadd [#allocation3], %s45
      %s47 = sshll.u32 [#allocation6], 4
      %s48 = int_to_ptr.vmem [resolvable:$true] %s47
      %53 = dma.hbm_to_vmem [thread:$0]  %s3, 256, %s48, [#allocation3], 128, 128, 8
    $region17: #{decoder_forward.1} parent=1 // pred_fallthru
      _
    // Predicated region
    $region18: #{decoder_forward.1} parent=1 // pred_check
      _
    $region19: #{decoder_forward.1} parent=1 // pred_check_branch
      %55 = sbr.rel (0) target = $region21
    $region20: #{decoder_forward.1} parent=1 // pred_region
      _
    $region21: #{decoder_forward.1} parent=1 // pred_fallthru
      _
    // Predicated region
    $region22: #{decoder_forward.1} parent=1 // pred_check
      _
    $region23: #{decoder_forward.1} parent=1 // pred_check_branch
      %57 = sbr.rel (0) target = $region25
    $region24: #{decoder_forward.1} parent=1 // pred_region
      %s59 = ssub.s32 512, 512
      %60 = vsyncadd [#allocation8], %s59
      %s61 = sshll.u32 [#allocation7], 4
      %s62 = int_to_ptr.vmem [resolvable:$true] %s61
      %67 = dma.hbm_to_vmem [thread:$0]  %s5, 512, %s62, [#allocation8], 128, 128, 8
    $region25: #{decoder_forward.1} parent=1 // pred_fallthru
      _
    // Predicated region
    $region26: #{decoder_forward.1} parent=1 // pred_check
      _
    $region27: #{decoder_forward.1} parent=1 // pred_check_branch
      %69 = sbr.rel (0) target = $region29
    $region28: #{decoder_forward.1} parent=1 // pred_region
      _
    $region29: #{decoder_forward.1} parent=1 // pred_fallthru
      _
    // Predicated region
    $region30: #{decoder_forward.1} parent=1 // pred_check
      _
    $region31: #{decoder_forward.1} parent=1 // pred_check_branch
      %71 = sbr.rel (0) target = $region33
    $region32: #{decoder_forward.1} parent=1 // pred_region
      %s73 = ssub.s32 512, 512
      %74 = vsyncadd [#allocation8], %s73
      %s75 = sshll.u32 [#allocation9], 4
      %s76 = int_to_ptr.vmem [resolvable:$true] %s75
      %81 = dma.hbm_to_vmem [thread:$0]  %s7, 512, %s76, [#allocation8], 128, 128, 8
    $region33: #{decoder_forward.1} parent=1 // pred_fallthru
      _
    // Predicated region
    $region34: #{decoder_forward.1} parent=1 // pred_check
      _
    $region35: #{decoder_forward.1} parent=1 // pred_check_branch
      %83 = sbr.rel (0) target = $region37
    $region36: #{decoder_forward.1} parent=1 // pred_region
      _
    $region37: #{decoder_forward.1} parent=1 // pred_fallthru
      _
    // Predicated region
    $region38: #{decoder_forward.1} parent=1 // pred_check
      _
    $region39: #{decoder_forward.1} parent=1 // pred_check_branch
      %85 = sbr.rel (0) target = $region41
    $region40: #{decoder_forward.1} parent=1 // pred_region
      _
    $region41: #{decoder_forward.1} parent=1 // pred_fallthru
      _
    // Predicated region
    $region42: #{decoder_forward.1} parent=1 // pred_check
      _
    $region43: #{decoder_forward.1} parent=1 // pred_check_branch
      %87 = sbr.rel (0) target = $region45
    $region44: #{decoder_forward.1} parent=1 // pred_region
      _
    $region45: #{decoder_forward.1} parent=1 // pred_fallthru
      _
    // Predicated region
    $region46: #{decoder_forward.1} parent=1 // pred_check
      _
    $region47: #{decoder_forward.1} parent=1 // pred_check_branch
      %89 = sbr.rel (0) target = $region49
    $region48: #{decoder_forward.1} parent=1 // pred_region
      %s91 = ssub.s32 2048, 2048
      %92 = vsyncadd [#allocation11], %s91
      %s93 = sshll.u32 [#allocation10], 4
      %s94 = int_to_ptr.vmem [resolvable:$true] %s93
      %99 = dma.hbm_to_vmem [thread:$0]  %s11, 2048, %s94, [#allocation11], 512, 512, 32
    $region49: #{decoder_forward.1} parent=1 // pred_fallthru
      _
    // Predicated region
    $region50: #{decoder_forward.1} parent=1 // pred_check
      _
    $region51: #{decoder_forward.1} parent=1 // pred_check_branch
      %101 = sbr.rel (0) target = $region53
    $region52: #{decoder_forward.1} parent=1 // pred_region
      _
    $region53: #{decoder_forward.1} parent=1 // pred_fallthru
      _
    // Predicated region
    $region54: #{decoder_forward.1} parent=1 // pred_check
      _
    $region55: #{decoder_forward.1} parent=1 // pred_check_branch
      %103 = sbr.rel (0) target = $region57
    $region56: #{decoder_forward.1} parent=1 // pred_region
      %s105 = ssub.s32 512, 512
      %106 = vsyncadd [#allocation11], %s105
      %s107 = sshll.u32 [#allocation12], 4
      %s108 = int_to_ptr.vmem [resolvable:$true] %s107
      %113 = dma.hbm_to_vmem [thread:$0]  %s13, 512, %s108, [#allocation11], 128, 128, 8
    $region57: #{decoder_forward.1} parent=1 // pred_fallthru
      _
    // Predicated region
    $region58: #{decoder_forward.1} parent=1 // pred_check
      _
    $region59: #{decoder_forward.1} parent=1 // pred_check_branch
      %115 = sbr.rel (0) target = $region61
    $region60: #{decoder_forward.1} parent=1 // pred_region
      _
    $region61: #{decoder_forward.1} parent=1 // pred_fallthru
      _
    // Predicated region
    $region62: #{decoder_forward.1} parent=1 // pred_check
      _
    $region63: #{decoder_forward.1} parent=1 // pred_check_branch
      %117 = sbr.rel (0) target = $region65
    $region64: #{decoder_forward.1} parent=1 // pred_region
      %118 = dma.done [#allocation5], 16
    $region65: #{decoder_forward.1} parent=1 // pred_fallthru
      _
    // Predicated region
    $region66: #{decoder_forward.1} parent=1 // pred_check
      _
    $region67: #{decoder_forward.1} parent=1 // pred_check_branch
      %120 = sbr.rel (0) target = $region69
    $region68: #{decoder_forward.1} parent=1 // pred_region
      %121 = dma.done [#allocation3], 256
    $region69: #{decoder_forward.1} parent=1 // pred_fallthru
      _
    // Predicated region
    $region70: #{decoder_forward.1} parent=1 // pred_check
      _
    $region71: #{decoder_forward.1} parent=1 // pred_check_branch
      %123 = sbr.rel (0) target = $region73
    $region72: #{decoder_forward.1} parent=1 // pred_region
      %124 = dma.done [#allocation8], 512
    $region73: #{decoder_forward.1} parent=1 // pred_fallthru
      _
    // Predicated region
    $region74: #{decoder_forward.1} parent=1 // pred_check
      _
    $region75: #{decoder_forward.1} parent=1 // pred_check_branch
      %126 = sbr.rel (0) target = $region77
    $region76: #{decoder_forward.1} parent=1 // pred_region
      %127 = dma.done [#allocation8], 512
    $region77: #{decoder_forward.1} parent=1 // pred_fallthru
      _
    // Predicated region
    $region78: #{decoder_forward.1} parent=1 // pred_check
      _
    $region79: #{decoder_forward.1} parent=1 // pred_check_branch
      %129 = sbr.rel (0) target = $region81
    $region80: #{decoder_forward.1} parent=1 // pred_region
      %130 = dma.done [#allocation11], 2048
    $region81: #{decoder_forward.1} parent=1 // pred_fallthru
      _
    // Predicated region
    $region82: #{decoder_forward.1} parent=1 // pred_check
      _
    $region83: #{decoder_forward.1} parent=1 // pred_check_branch
      %132 = sbr.rel (0) target = $region85
    $region84: #{decoder_forward.1} parent=1 // pred_region
      %133 = dma.done [#allocation11], 512
    $region85: #{decoder_forward.1} parent=1 // pred_fallthru
      _
    %134 = sfence
    %s135 = sld [smem:[#allocation2]]
    %p136 = scmp.gt.s32.totalorder %s135, 0
    %s137 = scalar_select %p136, %s135, 0
    %p138 = scmp.lt.s32.totalorder %s137, 63
    %s139 = scalar_select %p138, %s137, 63
    %s140 = scalar_lea.vmem %s4, %s139
    %v141 = vld [vmem:[%s140] sm:$0x1]
    %s142 = sld [smem:[#allocation2 + $0x1]]
    %p143 = scmp.gt.s32.totalorder %s142, 0
    %s144 = scalar_select %p143, %s142, 0
    %p145 = scmp.lt.s32.totalorder %s144, 63
    %s146 = scalar_select %p145, %s144, 63
    %s147 = scalar_lea.vmem %s4, %s146
    %v148 = vld [vmem:[%s147] sm:$0x1]
    %v150 = vlaneseq
    %v151 = vshrl.u32 %v150, 7
    %v152 = vsub.s32 0, %v151
    %v153 = vrot.slane %v148, %v152
    %vm155 = vcmask 1040384
    %v156 = vsel %vm155, %v141, %v153
    %v157 = vld [vmem:[%s1] sm:$0x3]
    %v158 = vld [vmem:[%s2] sm:$0x3]
    %v159 = vld [vmem:[#allocation6] sm:$0xff]
    %v160 = vld [vmem:[#allocation6 + $0x8] sm:$0xff]
    %v161 = vld [vmem:[#allocation7] sm:$0xff]
    %v162 = vld [vmem:[#allocation7 + $0x8] sm:$0xff]
    %v163 = vld [vmem:[#allocation7 + $0x10] sm:$0xff]
    %v164 = vld [vmem:[#allocation7 + $0x18] sm:$0xff]
    %vm165 = vcmask 261120
    %v167 = vsel %vm165, %v158, 0
    %169 = vmatprep.subr.mxu0 0.0
    %170 = vmatpush1.msra.mxu0 %v161
    %171 = vmatprep.subr.mxu0 0.0
    %172 = vmatpush1.msra.mxu0 %v162
    %173 = vmatprep.subr.mxu0 0.0
    %174 = vmatpush1.msra.mxu0 %v163
    %175 = vmatprep.subr.mxu0 0.0
    %176 = vmatpush1.msra.mxu0 %v164
    %177 = vmatprep.subr.mxu0 0.0
    %178 = vmatpush1.msra.mxu0 0.0
    %179 = vmatprep.subr.mxu0 0.0
    %180 = vmatpush1.msra.mxu0 0.0
    %181 = vmatprep.subr.mxu0 0.0
    %182 = vmatpush1.msra.mxu0 0.0
    %183 = vmatprep.subr.mxu0 0.0
    %184 = vmatpush1.msra.mxu0 0.0
    %185 = vmatprep.subr.mxu0 0.0
    %186 = vmatpush1.msra.mxu0 0.0
    %187 = vmatprep.subr.mxu0 0.0
    %188 = vmatpush1.msra.mxu0 0.0
    %189 = vmatprep.subr.mxu0 0.0
    %190 = vmatpush1.msra.mxu0 0.0
    %191 = vmatprep.subr.mxu0 0.0
    %192 = vmatpush1.msra.mxu0 0.0
    %193 = vmatprep.subr.mxu0 0.0
    %194 = vmatpush1.msra.mxu0 0.0
    %195 = vmatprep.subr.mxu0 0.0
    %196 = vmatpush1.msra.mxu0 0.0
    %197 = vmatprep.subr.mxu0 0.0
    %198 = vmatpush1.msra.mxu0 0.0
    %199 = vmatprep.subr.mxu0 0.0
    %200 = vmatpush1.msra.mxu0 0.0
    %201 = vmatprep.subr.mxu0 0.0
    %202 = vmatpush1.msra.mxu0 0.0
    %203 = vmatprep.subr.mxu0 0.0
    %204 = vmatpush1.msra.mxu0 0.0
    %205 = vmatprep.subr.mxu0 0.0
    %206 = vmatpush1.msra.mxu0 0.0
    %207 = vmatprep.subr.mxu0 0.0
    %208 = vmatpush1.msra.mxu0 0.0
    %209 = vmatprep.subr.mxu0 0.0
    %210 = vmatpush1.msra.mxu0 0.0
    %211 = vmatprep.subr.mxu0 0.0
    %212 = vmatpush1.msra.mxu0 0.0
    %213 = vmatprep.subr.mxu0 0.0
    %214 = vmatpush1.msra.mxu0 0.0
    %215 = vmatprep.subr.mxu0 0.0
    %216 = vmatpush1.msra.mxu0 0.0
    %217 = vmatprep.subr.mxu0 0.0
    %218 = vmatpush1.msra.mxu0 0.0
    %219 = vmatprep.subr.mxu0 0.0
    %220 = vmatpush1.msra.mxu0 0.0
    %221 = vmatprep.subr.mxu0 0.0
    %222 = vmatpush1.msra.mxu0 0.0
    %223 = vmatprep.subr.mxu0 0.0
    %224 = vmatpush1.msra.mxu0 0.0
    %225 = vmatprep.subr.mxu0 0.0
    %226 = vmatpush1.msra.mxu0 0.0
    %227 = vmatprep.subr.mxu0 0.0
    %228 = vmatpush1.msra.mxu0 0.0
    %229 = vmatprep.subr.mxu0 0.0
    %230 = vmatpush1.msra.mxu0 0.0
    %231 = vmatprep.subr.mxu0 0.0
    %232 = vmatpush1.msra.mxu0 0.0
    %233 = vmatprep.mubr.f32.mxu0 0.0
    %234 = vmatmul.mubr.f32.gmra.mrb[0].mxu0 %v167
    %v235 = vpop.f32.mrb[0].mxu0
    %v236 = vadd.f32 0.0, %v235
    %v237 = vpop.f32.mrb[0].mxu0
    %238 = vdwg.mxu0
    %v241 = vunpack.c.l.s4 1966171168
    %v242 = vunpack.c.0.s8 %v241
    %v243 = vlaneseq
    %v244 = vshrl.u32 %v243, 7
    %v245 = vsub.s32 %v242, %v244
    %v246 = vrot.slane %v236, %v245
    %v247 = vcombine.high %v246, %v246
    %v249 = vunpack.c.l.s4 1966171168
    %v250 = vunpack.c.0.s8 %v249
    %v251 = vlaneseq
    %v252 = vshrl.u32 %v251, 7
    %v253 = vsub.s32 %v250, %v252
    %v254 = vrot.slane %v246, %v253
    %v256 = vunpack.c.l.s4 1966171168
    %v257 = vunpack.c.0.s8 %v256
    %v258 = vlaneseq
    %v259 = vshrl.u32 %v258, 7
    %v260 = vsub.s32 %v257, %v259
    %v261 = vrot.slane %v247, %v260
    %v262 = vlaneseq
    %v263 = vshrl.u32 %v262, 7
    %v264 = vsub.s32 0, %v263
    %v265 = vrot.slane %v254, %v264
    %v266 = vlaneseq
    %v267 = vshrl.u32 %v266, 7
    %v268 = vsub.s32 0, %v267
    %v269 = vrot.slane %v261, %v268
    %v272 = vmul.f32 %v265, %v159
    %v273 = vmul.f32 %v269, %v160
    %vm274 = vcmask 523264
    %v275 = vsel %vm274, %v272, 0.0
    %276 = vadd.xlane.f32.xlu0 %v275
    %v277 = vpop.xlane.xlu0 %276
    %v278 = vsel %vm274, %v273, 0.0
    %279 = vadd.xlane.f32.xlu0 %v278
    %v280 = vpop.xlane.xlu0 %279
    %v283 = vlaneseq
    %v284 = vand.u32 %v283, 127
    %v285 = vlaneseq
    %v286 = vshrl.u32 %v285, 7
    %v287 = vsub.s32 %v284, %v286
    %v288 = vrot.slane %v277, %v287
    %v289 = vlaneseq
    %v290 = vshrl.u32 %v289, 7
    %v291 = vsub.s32 %v284, %v290
    %v292 = vrot.slane %v280, %v291
    %vm293 = vcmask 1041409
    %v294 = vsel %vm293, %v292, %v288
    %vm296 = vcmask 58368
    %v297 = vsel %vm296, %v294, -inf
    %298 = vmax.xlane.f32.xlu0 %v297
    %v299 = vpop.xlane.xlu0 %298
    %v301 = vlaneseq
    %v302 = vshrl.u32 %v301, 7
    %v303 = vsub.s32 0, %v302
    %v304 = vrot.slane %v299, %v303
    %v305 = vlaneseq
    %v306 = vshrl.u32 %v305, 7
    %v307 = vsub.s32 1, %v306
    %v308 = vrot.slane %v299, %v307
    %v311 = vsub.f32 %v277, %v304
    %v312 = vsub.f32 %v280, %v308
    %v313 = vmul.f32 %v311, 1.442695
    %v314 = vpow.pop %v313
    %v315 = vmul.f32 %v312, 1.442695
    %v316 = vpow.pop %v315
    %319 = vset.pattern.permute.xlu0 0
    %320 = vperm.xlu0 %319, %v314
    %v321 = vpop.permute.xlu0 %320
    %322 = vset.pattern.permute.xlu0 0
    %323 = vperm.xlu0 %322, %v316
    %v324 = vpop.permute.xlu0 %323
    %v325 = vlaneseq
    %v326 = vshrl.u32 %v325, 7
    %v327 = vsub.s32 %v284, %v326
    %v328 = vrot.slane %v321, %v327
    %v329 = vlaneseq
    %v330 = vshrl.u32 %v329, 7
    %v331 = vsub.s32 %v284, %v330
    %v332 = vrot.slane %v324, %v331
    %v333 = vsel %vm293, %v332, %v328
    %v335 = vsel %vm296, %v333, 0.0
    %336 = vadd.xlane.f32.xlu0 %v335
    %v337 = vpop.xlane.xlu0 %336
    %v338 = vrcp.pop %v337
    %v340 = vlaneseq
    %v341 = vshrl.u32 %v340, 7
    %v342 = vsub.s32 0, %v341
    %v343 = vrot.slane %v338, %v342
    %v344 = vlaneseq
    %v345 = vshrl.u32 %v344, 7
    %v346 = vsub.s32 1, %v345
    %v347 = vrot.slane %v338, %v346
    %v350 = vmul.f32 %v314, %v343
    %v351 = vmul.f32 %v316, %v347
    %353 = vset.pattern.permute.xlu0 0
    %354 = vperm.xlu0 %353, %v350
    %v355 = vpop.permute.xlu0 %354
    %358 = vset.pattern.permute.xlu0 0
    %359 = vperm.xlu0 %358, %v351
    %v360 = vpop.permute.xlu0 %359
    %v362 = vmul.f32 %v355, %v159
    %v363 = vmul.f32 %v360, %v160
    %v364 = vsel %vm274, %v362, 0.0
    %v365 = vrot.slane %v364, 4
    %v366 = vadd.f32 %v364, %v365
    %v367 = vrot.slane %v366, 2
    %v368 = vadd.f32 %v366, %v367
    %v369 = vrot.slane %v368, 1
    %v370 = vadd.f32 %v368, %v369
    %v371 = vsel %vm274, %v363, 0.0
    %v372 = vrot.slane %v371, 4
    %v373 = vadd.f32 %v371, %v372
    %v374 = vrot.slane %v373, 2
    %v375 = vadd.f32 %v373, %v374
    %v376 = vrot.slane %v375, 1
    %v377 = vadd.f32 %v375, %v376
    %v378 = vld [vmem:[%s6] sm:$0xff]
    %v379 = vld [vmem:[%s6 + $0x8] sm:$0xff]
    %v380 = vld [vmem:[%s6 + $0x10] sm:$0xff]
    %v381 = vld [vmem:[%s6 + $0x18] sm:$0xff]
    %v382 = vld [vmem:[%s6 + $0x20] sm:$0xff]
    %v383 = vld [vmem:[%s6 + $0x28] sm:$0xff]
    %v384 = vld [vmem:[%s6 + $0x30] sm:$0xff]
    %v385 = vld [vmem:[%s6 + $0x38] sm:$0xff]
    %v386 = vld [vmem:[#allocation9] sm:$0xff]
    %v387 = vld [vmem:[#allocation9 + $0x8] sm:$0xff]
    %v388 = vld [vmem:[#allocation9 + $0x10] sm:$0xff]
    %v389 = vld [vmem:[#allocation9 + $0x18] sm:$0xff]
    %390 = vmatprep.subr.mxu0 0.0
    %391 = vmatpush1.msra.mxu0 %v386
    %392 = vmatprep.subr.mxu0 0.0
    %393 = vmatpush1.msra.mxu0 %v387
    %394 = vmatprep.subr.mxu0 0.0
    %395 = vmatpush1.msra.mxu0 %v388
    %396 = vmatprep.subr.mxu0 0.0
    %397 = vmatpush1.msra.mxu0 %v389
    %398 = vmatprep.subr.mxu0 0.0
    %399 = vmatpush1.msra.mxu0 0.0
    %400 = vmatprep.subr.mxu0 0.0
    %401 = vmatpush1.msra.mxu0 0.0
    %402 = vmatprep.subr.mxu0 0.0
    %403 = vmatpush1.msra.mxu0 0.0
    %404 = vmatprep.subr.mxu0 0.0
    %405 = vmatpush1.msra.mxu0 0.0
    %406 = vmatprep.subr.mxu0 0.0
    %407 = vmatpush1.msra.mxu0 0.0
    %408 = vmatprep.subr.mxu0 0.0
    %409 = vmatpush1.msra.mxu0 0.0
    %410 = vmatprep.subr.mxu0 0.0
    %411 = vmatpush1.msra.mxu0 0.0
    %412 = vmatprep.subr.mxu0 0.0
    %413 = vmatpush1.msra.mxu0 0.0
    %414 = vmatprep.subr.mxu0 0.0
    %415 = vmatpush1.msra.mxu0 0.0
    %416 = vmatprep.subr.mxu0 0.0
    %417 = vmatpush1.msra.mxu0 0.0
    %418 = vmatprep.subr.mxu0 0.0
    %419 = vmatpush1.msra.mxu0 0.0
    %420 = vmatprep.subr.mxu0 0.0
    %421 = vmatpush1.msra.mxu0 0.0
    %422 = vmatprep.subr.mxu0 0.0
    %423 = vmatpush1.msra.mxu0 0.0
    %424 = vmatprep.subr.mxu0 0.0
    %425 = vmatpush1.msra.mxu0 0.0
    %426 = vmatprep.subr.mxu0 0.0
    %427 = vmatpush1.msra.mxu0 0.0
    %428 = vmatprep.subr.mxu0 0.0
    %429 = vmatpush1.msra.mxu0 0.0
    %430 = vmatprep.subr.mxu0 0.0
    %431 = vmatpush1.msra.mxu0 0.0
    %432 = vmatprep.subr.mxu0 0.0
    %433 = vmatpush1.msra.mxu0 0.0
    %434 = vmatprep.subr.mxu0 0.0
    %435 = vmatpush1.msra.mxu0 0.0
    %436 = vmatprep.subr.mxu0 0.0
    %437 = vmatpush1.msra.mxu0 0.0
    %438 = vmatprep.subr.mxu0 0.0
    %439 = vmatpush1.msra.mxu0 0.0
    %440 = vmatprep.subr.mxu0 0.0
    %441 = vmatpush1.msra.mxu0 0.0
    %442 = vmatprep.subr.mxu0 0.0
    %443 = vmatpush1.msra.mxu0 0.0
    %444 = vmatprep.subr.mxu0 0.0
    %445 = vmatpush1.msra.mxu0 0.0
    %446 = vmatprep.subr.mxu0 0.0
    %447 = vmatpush1.msra.mxu0 0.0
    %448 = vmatprep.subr.mxu0 0.0
    %449 = vmatpush1.msra.mxu0 0.0
    %450 = vmatprep.subr.mxu0 0.0
    %451 = vmatpush1.msra.mxu0 0.0
    %452 = vmatprep.subr.mxu0 0.0
    %453 = vmatpush1.msra.mxu0 0.0
    %454 = vmatprep.mubr.f32.mxu0 0.0
    %455 = vmatmul.mubr.f32.gmra.mrb[0].mxu0 %v167
    %v456 = vpop.f32.mrb[0].mxu0
    %v457 = vadd.f32 0.0, %v456
    %v458 = vpop.f32.mrb[0].mxu0
    %459 = vdwg.mxu0
    %v462 = vsel %vm293, %v377, %v370
    %v463 = vsel %vm274, %v462, 0
    %465 = vmatprep.subr.mxu0 0.0
    %466 = vmatpush1.msra.mxu0 %v378
    %467 = vmatprep.subr.mxu0 0.0
    %468 = vmatpush1.msra.mxu0 %v379
    %469 = vmatprep.subr.mxu0 0.0
    %470 = vmatpush1.msra.mxu0 %v380
    %471 = vmatprep.subr.mxu0 0.0
    %472 = vmatpush1.msra.mxu0 %v381
    %473 = vmatprep.subr.mxu0 0.0
    %474 = vmatpush1.msra.mxu0 %v382
    %475 = vmatprep.subr.mxu0 0.0
    %476 = vmatpush1.msra.mxu0 %v383
    %477 = vmatprep.subr.mxu0 0.0
    %478 = vmatpush1.msra.mxu0 %v384
    %479 = vmatprep.subr.mxu0 0.0
    %480 = vmatpush1.msra.mxu0 %v385
    %481 = vmatprep.subr.mxu0 0.0
    %482 = vmatpush1.msra.mxu0 0.0
    %483 = vmatprep.subr.mxu0 0.0
    %484 = vmatpush1.msra.mxu0 0.0
    %485 = vmatprep.subr.mxu0 0.0
    %486 = vmatpush1.msra.mxu0 0.0
    %487 = vmatprep.subr.mxu0 0.0
    %488 = vmatpush1.msra.mxu0 0.0
    %489 = vmatprep.subr.mxu0 0.0
    %490 = vmatpush1.msra.mxu0 0.0
    %491 = vmatprep.subr.mxu0 0.0
    %492 = vmatpush1.msra.mxu0 0.0
    %493 = vmatprep.subr.mxu0 0.0
    %494 = vmatpush1.msra.mxu0 0.0
    %495 = vmatprep.subr.mxu0 0.0
    %496 = vmatpush1.msra.mxu0 0.0
    %497 = vmatprep.subr.mxu0 0.0
    %498 = vmatpush1.msra.mxu0 0.0
    %499 = vmatprep.subr.mxu0 0.0
    %500 = vmatpush1.msra.mxu0 0.0
    %501 = vmatprep.subr.mxu0 0.0
    %502 = vmatpush1.msra.mxu0 0.0
    %503 = vmatprep.subr.mxu0 0.0
    %504 = vmatpush1.msra.mxu0 0.0
    %505 = vmatprep.subr.mxu0 0.0
    %506 = vmatpush1.msra.mxu0 0.0
    %507 = vmatprep.subr.mxu0 0.0
    %508 = vmatpush1.msra.mxu0 0.0
    %509 = vmatprep.subr.mxu0 0.0
    %510 = vmatpush1.msra.mxu0 0.0
    %511 = vmatprep.subr.mxu0 0.0
    %512 = vmatpush1.msra.mxu0 0.0
    %513 = vmatprep.subr.mxu0 0.0
    %514 = vmatpush1.msra.mxu0 0.0
    %515 = vmatprep.subr.mxu0 0.0
    %516 = vmatpush1.msra.mxu0 0.0
    %517 = vmatprep.subr.mxu0 0.0
    %518 = vmatpush1.msra.mxu0 0.0
    %519 = vmatprep.subr.mxu0 0.0
    %520 = vmatpush1.msra.mxu0 0.0
    %521 = vmatprep.subr.mxu0 0.0
    %522 = vmatpush1.msra.mxu0 0.0
    %523 = vmatprep.subr.mxu0 0.0
    %524 = vmatpush1.msra.mxu0 0.0
    %525 = vmatprep.subr.mxu0 0.0
    %526 = vmatpush1.msra.mxu0 0.0
    %527 = vmatprep.subr.mxu0 0.0
    %528 = vmatpush1.msra.mxu0 0.0
    %529 = vmatprep.mubr.f32.mxu0 0.0
    %530 = vmatmul.mubr.f32.gmra.mrb[0].mxu0 %v463
    %v531 = vpop.f32.mrb[0].mxu0
    %v532 = vadd.f32 %v457, %v531
    %v533 = vpop.f32.mrb[0].mxu0
    %534 = vdwg.mxu0
    %v535 = vld [vmem:[%s8] sm:$0x1]
    %v537 = vlaneseq
    %v538 = vshrl.u32 %v537, 7
    %v539 = vsub.s32 0, %v538
    %v540 = vrot.slane %v535, %v539
    %v542 = vadd.f32 %v532, %v540
    %v543 = vtanh.pop %v542
    %v544 = vld [vmem:[%s9] sm:$0xff]
    %v545 = vld [vmem:[%s9 + $0x8] sm:$0xff]
    %v546 = vld [vmem:[%s9 + $0x10] sm:$0xff]
    %v547 = vld [vmem:[%s9 + $0x18] sm:$0xff]
    %v548 = vld [vmem:[%s9 + $0x20] sm:$0xff]
    %v549 = vld [vmem:[%s9 + $0x28] sm:$0xff]
    %v550 = vld [vmem:[%s9 + $0x30] sm:$0xff]
    %v551 = vld [vmem:[%s9 + $0x38] sm:$0xff]
    %v552 = vld [vmem:[%s10] sm:$0xff]
    %v553 = vld [vmem:[%s10 + $0x8] sm:$0xff]
    %v554 = vld [vmem:[%s10 + $0x10] sm:$0xff]
    %v555 = vld [vmem:[%s10 + $0x18] sm:$0xff]
    %v556 = vld [vmem:[%s10 + $0x20] sm:$0xff]
    %v557 = vld [vmem:[%s10 + $0x28] sm:$0xff]
    %v558 = vld [vmem:[%s10 + $0x30] sm:$0xff]
    %v559 = vld [vmem:[%s10 + $0x38] sm:$0xff]
    %v560 = vld [vmem:[%s10 + $0x40] sm:$0xff]
    %v561 = vld [vmem:[%s10 + $0x48] sm:$0xff]
    %v562 = vld [vmem:[%s10 + $0x50] sm:$0xff]
    %v563 = vld [vmem:[%s10 + $0x58] sm:$0xff]
    %v564 = vld [vmem:[%s10 + $0x60] sm:$0xff]
    %v565 = vld [vmem:[%s10 + $0x68] sm:$0xff]
    %v566 = vld [vmem:[%s10 + $0x70] sm:$0xff]
    %v567 = vld [vmem:[%s10 + $0x78] sm:$0xff]
    %v569 = vsel %vm165, %v543, 0
    %571 = vmatprep.subr.mxu0 %v553
    %572 = vmatpush1.msra.mxu0 %v552
    %573 = vmatprep.subr.mxu0 %v557
    %574 = vmatpush1.msra.mxu0 %v556
    %575 = vmatprep.subr.mxu0 %v561
    %576 = vmatpush1.msra.mxu0 %v560
    %577 = vmatprep.subr.mxu0 %v565
    %578 = vmatpush1.msra.mxu0 %v564
    %579 = vmatprep.subr.mxu0 0.0
    %580 = vmatpush1.msra.mxu0 0.0
    %581 = vmatprep.subr.mxu0 0.0
    %582 = vmatpush1.msra.mxu0 0.0
    %583 = vmatprep.subr.mxu0 0.0
    %584 = vmatpush1.msra.mxu0 0.0
    %585 = vmatprep.subr.mxu0 0.0
    %586 = vmatpush1.msra.mxu0 0.0
    %587 = vmatprep.subr.mxu0 0.0
    %588 = vmatpush1.msra.mxu0 0.0
    %589 = vmatprep.subr.mxu0 0.0
    %590 = vmatpush1.msra.mxu0 0.0
    %591 = vmatprep.subr.mxu0 0.0
    %592 = vmatpush1.msra.mxu0 0.0
    %593 = vmatprep.subr.mxu0 0.0
    %594 = vmatpush1.msra.mxu0 0.0
    %595 = vmatprep.subr.mxu0 0.0
    %596 = vmatpush1.msra.mxu0 0.0
    %597 = vmatprep.subr.mxu0 0.0
    %598 = vmatpush1.msra.mxu0 0.0
    %599 = vmatprep.subr.mxu0 0.0
    %600 = vmatpush1.msra.mxu0 0.0
    %601 = vmatprep.subr.mxu0 0.0
    %602 = vmatpush1.msra.mxu0 0.0
    %603 = vmatprep.subr.mxu0 0.0
    %604 = vmatpush1.msra.mxu0 0.0
    %605 = vmatprep.subr.mxu0 0.0
    %606 = vmatpush1.msra.mxu0 0.0
    %607 = vmatprep.subr.mxu0 0.0
    %608 = vmatpush1.msra.mxu0 0.0
    %609 = vmatprep.subr.mxu0 0.0
    %610 = vmatpush1.msra.mxu0 0.0
    %611 = vmatprep.subr.mxu0 0.0
    %612 = vmatpush1.msra.mxu0 0.0
    %613 = vmatprep.subr.mxu0 0.0
    %614 = vmatpush1.msra.mxu0 0.0
    %615 = vmatprep.subr.mxu0 0.0
    %616 = vmatpush1.msra.mxu0 0.0
    %617 = vmatprep.subr.mxu0 0.0
    %618 = vmatpush1.msra.mxu0 0.0
    %619 = vmatprep.subr.mxu0 0.0
    %620 = vmatpush1.msra.mxu0 0.0
    %621 = vmatprep.subr.mxu0 0.0
    %622 = vmatpush1.msra.mxu0 0.0
    %623 = vmatprep.subr.mxu0 0.0
    %624 = vmatpush1.msra.mxu0 0.0
    %625 = vmatprep.subr.mxu0 0.0
    %626 = vmatpush1.msra.mxu0 0.0
    %627 = vmatprep.subr.mxu0 0.0
    %628 = vmatpush1.msra.mxu0 0.0
    %629 = vmatprep.subr.mxu0 0.0
    %630 = vmatpush1.msra.mxu0 0.0
    %631 = vmatprep.subr.mxu0 0.0
    %632 = vmatpush1.msra.mxu0 0.0
    %633 = vmatprep.subr.mxu0 0.0
    %634 = vmatpush1.msra.mxu0 0.0
    %635 = vmatprep.mubr.f32.mxu0 0.0
    %636 = vmatmul.mubr.f32.gmra.mrb[0].mxu0 %v569
    %v637 = vpop.f32.mrb[0].mxu0
    %v638 = vadd.f32 0.0, %v637
    %v639 = vpop.f32.mrb[0].mxu0
    %v640 = vadd.f32 0.0, %v639
    %641 = vdwg.mxu0
    %642 = vmatprep.subr.mxu0 %v555
    %643 = vmatpush1.msra.mxu0 %v554
    %644 = vmatprep.subr.mxu0 %v559
    %645 = vmatpush1.msra.mxu0 %v558
    %646 = vmatprep.subr.mxu0 %v563
    %647 = vmatpush1.msra.mxu0 %v562
    %648 = vmatprep.subr.mxu0 %v567
    %649 = vmatpush1.msra.mxu0 %v566
    %650 = vmatprep.subr.mxu0 0.0
    %651 = vmatpush1.msra.mxu0 0.0
    %652 = vmatprep.subr.mxu0 0.0
    %653 = vmatpush1.msra.mxu0 0.0
    %654 = vmatprep.subr.mxu0 0.0
    %655 = vmatpush1.msra.mxu0 0.0
    %656 = vmatprep.subr.mxu0 0.0
    %657 = vmatpush1.msra.mxu0 0.0
    %658 = vmatprep.subr.mxu0 0.0
    %659 = vmatpush1.msra.mxu0 0.0
    %660 = vmatprep.subr.mxu0 0.0
    %661 = vmatpush1.msra.mxu0 0.0
    %662 = vmatprep.subr.mxu0 0.0
    %663 = vmatpush1.msra.mxu0 0.0
    %664 = vmatprep.subr.mxu0 0.0
    %665 = vmatpush1.msra.mxu0 0.0
    %666 = vmatprep.subr.mxu0 0.0
    %667 = vmatpush1.msra.mxu0 0.0
    %668 = vmatprep.subr.mxu0 0.0
    %669 = vmatpush1.msra.mxu0 0.0
    %670 = vmatprep.subr.mxu0 0.0
    %671 = vmatpush1.msra.mxu0 0.0
    %672 = vmatprep.subr.mxu0 0.0
    %673 = vmatpush1.msra.mxu0 0.0
    %674 = vmatprep.subr.mxu0 0.0
    %675 = vmatpush1.msra.mxu0 0.0
    %676 = vmatprep.subr.mxu0 0.0
    %677 = vmatpush1.msra.mxu0 0.0
    %678 = vmatprep.subr.mxu0 0.0
    %679 = vmatpush1.msra.mxu0 0.0
    %680 = vmatprep.subr.mxu0 0.0
    %681 = vmatpush1.msra.mxu0 0.0
    %682 = vmatprep.subr.mxu0 0.0
    %683 = vmatpush1.msra.mxu0 0.0
    %684 = vmatprep.subr.mxu0 0.0
    %685 = vmatpush1.msra.mxu0 0.0
    %686 = vmatprep.subr.mxu0 0.0
    %687 = vmatpush1.msra.mxu0 0.0
    %688 = vmatprep.subr.mxu0 0.0
    %689 = vmatpush1.msra.mxu0 0.0
    %690 = vmatprep.subr.mxu0 0.0
    %691 = vmatpush1.msra.mxu0 0.0
    %692 = vmatprep.subr.mxu0 0.0
    %693 = vmatpush1.msra.mxu0 0.0
    %694 = vmatprep.subr.mxu0 0.0
    %695 = vmatpush1.msra.mxu0 0.0
    %696 = vmatprep.subr.mxu0 0.0
    %697 = vmatpush1.msra.mxu0 0.0
    %698 = vmatprep.subr.mxu0 0.0
    %699 = vmatpush1.msra.mxu0 0.0
    %700 = vmatprep.subr.mxu0 0.0
    %701 = vmatpush1.msra.mxu0 0.0
    %702 = vmatprep.subr.mxu0 0.0
    %703 = vmatpush1.msra.mxu0 0.0
    %704 = vmatprep.subr.mxu0 0.0
    %705 = vmatpush1.msra.mxu0 0.0
    %706 = vmatprep.mubr.f32.mxu0 0.0
    %707 = vmatmul.mubr.f32.gmra.mrb[0].mxu0 %v569
    %v708 = vpop.f32.mrb[0].mxu0
    %v709 = vadd.f32 0.0, %v708
    %v710 = vpop.f32.mrb[0].mxu0
    %v711 = vadd.f32 0.0, %v710
    %712 = vdwg.mxu0
    %vm713 = vcmask 130048
    %v715 = vsel %vm713, %v156, 0
    %717 = vmatprep.subr.mxu0 %v545
    %718 = vmatpush1.msra.mxu0 %v544
    %719 = vmatprep.subr.mxu0 %v549
    %720 = vmatpush1.msra.mxu0 %v548
    %721 = vmatprep.subr.mxu0 0.0
    %722 = vmatpush1.msra.mxu0 0.0
    %723 = vmatprep.subr.mxu0 0.0
    %724 = vmatpush1.msra.mxu0 0.0
    %725 = vmatprep.subr.mxu0 0.0
    %726 = vmatpush1.msra.mxu0 0.0
    %727 = vmatprep.subr.mxu0 0.0
    %728 = vmatpush1.msra.mxu0 0.0
    %729 = vmatprep.subr.mxu0 0.0
    %730 = vmatpush1.msra.mxu0 0.0
    %731 = vmatprep.subr.mxu0 0.0
    %732 = vmatpush1.msra.mxu0 0.0
    %733 = vmatprep.subr.mxu0 0.0
    %734 = vmatpush1.msra.mxu0 0.0
    %735 = vmatprep.subr.mxu0 0.0
    %736 = vmatpush1.msra.mxu0 0.0
    %737 = vmatprep.subr.mxu0 0.0
    %738 = vmatpush1.msra.mxu0 0.0
    %739 = vmatprep.subr.mxu0 0.0
    %740 = vmatpush1.msra.mxu0 0.0
    %741 = vmatprep.subr.mxu0 0.0
    %742 = vmatpush1.msra.mxu0 0.0
    %743 = vmatprep.subr.mxu0 0.0
    %744 = vmatpush1.msra.mxu0 0.0
    %745 = vmatprep.subr.mxu0 0.0
    %746 = vmatpush1.msra.mxu0 0.0
    %747 = vmatprep.subr.mxu0 0.0
    %748 = vmatpush1.msra.mxu0 0.0
    %749 = vmatprep.subr.mxu0 0.0
    %750 = vmatpush1.msra.mxu0 0.0
    %751 = vmatprep.subr.mxu0 0.0
    %752 = vmatpush1.msra.mxu0 0.0
    %753 = vmatprep.subr.mxu0 0.0
    %754 = vmatpush1.msra.mxu0 0.0
    %755 = vmatprep.subr.mxu0 0.0
    %756 = vmatpush1.msra.mxu0 0.0
    %757 = vmatprep.subr.mxu0 0.0
    %758 = vmatpush1.msra.mxu0 0.0
    %759 = vmatprep.subr.mxu0 0.0
    %760 = vmatpush1.msra.mxu0 0.0
    %761 = vmatprep.subr.mxu0 0.0
    %762 = vmatpush1.msra.mxu0 0.0
    %763 = vmatprep.subr.mxu0 0.0
    %764 = vmatpush1.msra.mxu0 0.0
    %765 = vmatprep.subr.mxu0 0.0
    %766 = vmatpush1.msra.mxu0 0.0
    %767 = vmatprep.subr.mxu0 0.0
    %768 = vmatpush1.msra.mxu0 0.0
    %769 = vmatprep.subr.mxu0 0.0
    %770 = vmatpush1.msra.mxu0 0.0
    %771 = vmatprep.subr.mxu0 0.0
    %772 = vmatpush1.msra.mxu0 0.0
    %773 = vmatprep.subr.mxu0 0.0
    %774 = vmatpush1.msra.mxu0 0.0
    %775 = vmatprep.subr.mxu0 0.0
    %776 = vmatpush1.msra.mxu0 0.0
    %777 = vmatprep.subr.mxu0 0.0
    %778 = vmatpush1.msra.mxu0 0.0
    %779 = vmatprep.subr.mxu0 0.0
    %780 = vmatpush1.msra.mxu0 0.0
    %781 = vmatprep.mubr.f32.mxu0 0.0
    %782 = vmatmul.mubr.f32.gmra.mrb[0].mxu0 %v715
    %v783 = vpop.f32.mrb[0].mxu0
    %v784 = vadd.f32 %v638, %v783
    %v785 = vpop.f32.mrb[0].mxu0
    %v786 = vadd.f32 %v640, %v785
    %787 = vdwg.mxu0
    %788 = vmatprep.subr.mxu0 %v547
    %789 = vmatpush1.msra.mxu0 %v546
    %790 = vmatprep.subr.mxu0 %v551
    %791 = vmatpush1.msra.mxu0 %v550
    %792 = vmatprep.subr.mxu0 0.0
    %793 = vmatpush1.msra.mxu0 0.0
    %794 = vmatprep.subr.mxu0 0.0
    %795 = vmatpush1.msra.mxu0 0.0
    %796 = vmatprep.subr.mxu0 0.0
    %797 = vmatpush1.msra.mxu0 0.0
    %798 = vmatprep.subr.mxu0 0.0
    %799 = vmatpush1.msra.mxu0 0.0
    %800 = vmatprep.subr.mxu0 0.0
    %801 = vmatpush1.msra.mxu0 0.0
    %802 = vmatprep.subr.mxu0 0.0
    %803 = vmatpush1.msra.mxu0 0.0
    %804 = vmatprep.subr.mxu0 0.0
    %805 = vmatpush1.msra.mxu0 0.0
    %806 = vmatprep.subr.mxu0 0.0
    %807 = vmatpush1.msra.mxu0 0.0
    %808 = vmatprep.subr.mxu0 0.0
    %809 = vmatpush1.msra.mxu0 0.0
    %810 = vmatprep.subr.mxu0 0.0
    %811 = vmatpush1.msra.mxu0 0.0
    %812 = vmatprep.subr.mxu0 0.0
    %813 = vmatpush1.msra.mxu0 0.0
    %814 = vmatprep.subr.mxu0 0.0
    %815 = vmatpush1.msra.mxu0 0.0
    %816 = vmatprep.subr.mxu0 0.0
    %817 = vmatpush1.msra.mxu0 0.0
    %818 = vmatprep.subr.mxu0 0.0
    %819 = vmatpush1.msra.mxu0 0.0
    %820 = vmatprep.subr.mxu0 0.0
    %821 = vmatpush1.msra.mxu0 0.0
    %822 = vmatprep.subr.mxu0 0.0
    %823 = vmatpush1.msra.mxu0 0.0
    %824 = vmatprep.subr.mxu0 0.0
    %825 = vmatpush1.msra.mxu0 0.0
    %826 = vmatprep.subr.mxu0 0.0
    %827 = vmatpush1.msra.mxu0 0.0
    %828 = vmatprep.subr.mxu0 0.0
    %829 = vmatpush1.msra.mxu0 0.0
    %830 = vmatprep.subr.mxu0 0.0
    %831 = vmatpush1.msra.mxu0 0.0
    %832 = vmatprep.subr.mxu0 0.0
    %833 = vmatpush1.msra.mxu0 0.0
    %834 = vmatprep.subr.mxu0 0.0
    %835 = vmatpush1.msra.mxu0 0.0
    %836 = vmatprep.subr.mxu0 0.0
    %837 = vmatpush1.msra.mxu0 0.0
    %838 = vmatprep.subr.mxu0 0.0
    %839 = vmatpush1.msra.mxu0 0.0
    %840 = vmatprep.subr.mxu0 0.0
    %841 = vmatpush1.msra.mxu0 0.0
    %842 = vmatprep.subr.mxu0 0.0
    %843 = vmatpush1.msra.mxu0 0.0
    %844 = vmatprep.subr.mxu0 0.0
    %845 = vmatpush1.msra.mxu0 0.0
    %846 = vmatprep.subr.mxu0 0.0
    %847 = vmatpush1.msra.mxu0 0.0
    %848 = vmatprep.subr.mxu0 0.0
    %849 = vmatpush1.msra.mxu0 0.0
    %850 = vmatprep.subr.mxu0 0.0
    %851 = vmatpush1.msra.mxu0 0.0
    %852 = vmatprep.mubr.f32.mxu0 0.0
    %853 = vmatmul.mubr.f32.gmra.mrb[0].mxu0 %v715
    %v854 = vpop.f32.mrb[0].mxu0
    %v855 = vadd.f32 %v709, %v854
    %v856 = vpop.f32.mrb[0].mxu0
    %v857 = vadd.f32 %v711, %v856
    %858 = vdwg.mxu0
    %v859 = vld [vmem:[#allocation10] sm:$0xff]
    %v860 = vld [vmem:[#allocation10 + $0x8] sm:$0xff]
    %v861 = vld [vmem:[#allocation10 + $0x10] sm:$0xff]
    %v862 = vld [vmem:[#allocation10 + $0x18] sm:$0xff]
    %v863 = vld [vmem:[#allocation10 + $0x20] sm:$0xff]
    %v864 = vld [vmem:[#allocation10 + $0x28] sm:$0xff]
    %v865 = vld [vmem:[#allocation10 + $0x30] sm:$0xff]
    %v866 = vld [vmem:[#allocation10 + $0x38] sm:$0xff]
    %v867 = vld [vmem:[#allocation10 + $0x40] sm:$0xff]
    %v868 = vld [vmem:[#allocation10 + $0x48] sm:$0xff]
    %v869 = vld [vmem:[#allocation10 + $0x50] sm:$0xff]
    %v870 = vld [vmem:[#allocation10 + $0x58] sm:$0xff]
    %v871 = vld [vmem:[#allocation10 + $0x60] sm:$0xff]
    %v872 = vld [vmem:[#allocation10 + $0x68] sm:$0xff]
    %v873 = vld [vmem:[#allocation10 + $0x70] sm:$0xff]
    %v874 = vld [vmem:[#allocation10 + $0x78] sm:$0xff]
    %v876 = vsel %vm165, %v157, 0
    %878 = vmatprep.subr.mxu0 %v860
    %879 = vmatpush1.msra.mxu0 %v859
    %880 = vmatprep.subr.mxu0 %v864
    %881 = vmatpush1.msra.mxu0 %v863
    %882 = vmatprep.subr.mxu0 %v868
    %883 = vmatpush1.msra.mxu0 %v867
    %884 = vmatprep.subr.mxu0 %v872
    %885 = vmatpush1.msra.mxu0 %v871
    %886 = vmatprep.subr.mxu0 0.0
    %887 = vmatpush1.msra.mxu0 0.0
    %888 = vmatprep.subr.mxu0 0.0
    %889 = vmatpush1.msra.mxu0 0.0
    %890 = vmatprep.subr.mxu0 0.0
    %891 = vmatpush1.msra.mxu0 0.0
    %892 = vmatprep.subr.mxu0 0.0
    %893 = vmatpush1.msra.mxu0 0.0
    %894 = vmatprep.subr.mxu0 0.0
    %895 = vmatpush1.msra.mxu0 0.0
    %896 = vmatprep.subr.mxu0 0.0
    %897 = vmatpush1.msra.mxu0 0.0
    %898 = vmatprep.subr.mxu0 0.0
    %899 = vmatpush1.msra.mxu0 0.0
    %900 = vmatprep.subr.mxu0 0.0
    %901 = vmatpush1.msra.mxu0 0.0
    %902 = vmatprep.subr.mxu0 0.0
    %903 = vmatpush1.msra.mxu0 0.0
    %904 = vmatprep.subr.mxu0 0.0
    %905 = vmatpush1.msra.mxu0 0.0
    %906 = vmatprep.subr.mxu0 0.0
    %907 = vmatpush1.msra.mxu0 0.0
    %908 = vmatprep.subr.mxu0 0.0
    %909 = vmatpush1.msra.mxu0 0.0
    %910 = vmatprep.subr.mxu0 0.0
    %911 = vmatpush1.msra.mxu0 0.0
    %912 = vmatprep.subr.mxu0 0.0
    %913 = vmatpush1.msra.mxu0 0.0
    %914 = vmatprep.subr.mxu0 0.0
    %915 = vmatpush1.msra.mxu0 0.0
    %916 = vmatprep.subr.mxu0 0.0
    %917 = vmatpush1.msra.mxu0 0.0
    %918 = vmatprep.subr.mxu0 0.0
    %919 = vmatpush1.msra.mxu0 0.0
    %920 = vmatprep.subr.mxu0 0.0
    %921 = vmatpush1.msra.mxu0 0.0
    %922 = vmatprep.subr.mxu0 0.0
    %923 = vmatpush1.msra.mxu0 0.0
    %924 = vmatprep.subr.mxu0 0.0
    %925 = vmatpush1.msra.mxu0 0.0
    %926 = vmatprep.subr.mxu0 0.0
    %927 = vmatpush1.msra.mxu0 0.0
    %928 = vmatprep.subr.mxu0 0.0
    %929 = vmatpush1.msra.mxu0 0.0
    %930 = vmatprep.subr.mxu0 0.0
    %931 = vmatpush1.msra.mxu0 0.0
    %932 = vmatprep.subr.mxu0 0.0
    %933 = vmatpush1.msra.mxu0 0.0
    %934 = vmatprep.subr.mxu0 0.0
    %935 = vmatpush1.msra.mxu0 0.0
    %936 = vmatprep.subr.mxu0 0.0
    %937 = vmatpush1.msra.mxu0 0.0
    %938 = vmatprep.subr.mxu0 0.0
    %939 = vmatpush1.msra.mxu0 0.0
    %940 = vmatprep.subr.mxu0 0.0
    %941 = vmatpush1.msra.mxu0 0.0
    %942 = vmatprep.mubr.f32.mxu0 0.0
    %943 = vmatmul.mubr.f32.gmra.mrb[0].mxu0 %v876
    %v944 = vpop.f32.mrb[0].mxu0
    %v945 = vadd.f32 0.0, %v944
    %v946 = vpop.f32.mrb[0].mxu0
    %v947 = vadd.f32 0.0, %v946
    %948 = vdwg.mxu0
    %949 = vmatprep.subr.mxu0 %v862
    %950 = vmatpush1.msra.mxu0 %v861
    %951 = vmatprep.subr.mxu0 %v866
    %952 = vmatpush1.msra.mxu0 %v865
    %953 = vmatprep.subr.mxu0 %v870
    %954 = vmatpush1.msra.mxu0 %v869
    %955 = vmatprep.subr.mxu0 %v874
    %956 = vmatpush1.msra.mxu0 %v873
    %957 = vmatprep.subr.mxu0 0.0
    %958 = vmatpush1.msra.mxu0 0.0
    %959 = vmatprep.subr.mxu0 0.0
    %960 = vmatpush1.msra.mxu0 0.0
    %961 = vmatprep.subr.mxu0 0.0
    %962 = vmatpush1.msra.mxu0 0.0
    %963 = vmatprep.subr.mxu0 0.0
    %964 = vmatpush1.msra.mxu0 0.0
    %965 = vmatprep.subr.mxu0 0.0
    %966 = vmatpush1.msra.mxu0 0.0
    %967 = vmatprep.subr.mxu0 0.0
    %968 = vmatpush1.msra.mxu0 0.0
    %969 = vmatprep.subr.mxu0 0.0
    %970 = vmatpush1.msra.mxu0 0.0
    %971 = vmatprep.subr.mxu0 0.0
    %972 = vmatpush1.msra.mxu0 0.0
    %973 = vmatprep.subr.mxu0 0.0
    %974 = vmatpush1.msra.mxu0 0.0
    %975 = vmatprep.subr.mxu0 0.0
    %976 = vmatpush1.msra.mxu0 0.0
    %977 = vmatprep.subr.mxu0 0.0
    %978 = vmatpush1.msra.mxu0 0.0
    %979 = vmatprep.subr.mxu0 0.0
    %980 = vmatpush1.msra.mxu0 0.0
    %981 = vmatprep.subr.mxu0 0.0
    %982 = vmatpush1.msra.mxu0 0.0
    %983 = vmatprep.subr.mxu0 0.0
    %984 = vmatpush1.msra.mxu0 0.0
    %985 = vmatprep.subr.mxu0 0.0
    %986 = vmatpush1.msra.mxu0 0.0
    %987 = vmatprep.subr.mxu0 0.0
    %988 = vmatpush1.msra.mxu0 0.0
    %989 = vmatprep.subr.mxu0 0.0
    %990 = vmatpush1.msra.mxu0 0.0
    %991 = vmatprep.subr.mxu0 0.0
    %992 = vmatpush1.msra.mxu0 0.0
    %993 = vmatprep.subr.mxu0 0.0
    %994 = vmatpush1.msra.mxu0 0.0
    %995 = vmatprep.subr.mxu0 0.0
    %996 = vmatpush1.msra.mxu0 0.0
    %997 = vmatprep.subr.mxu0 0.0
    %998 = vmatpush1.msra.mxu0 0.0
    %999 = vmatprep.subr.mxu0 0.0
    %1000 = vmatpush1.msra.mxu0 0.0
    %1001 = vmatprep.subr.mxu0 0.0
    %1002 = vmatpush1.msra.mxu0 0.0
    %1003 = vmatprep.subr.mxu0 0.0
    %1004 = vmatpush1.msra.mxu0 0.0
    %1005 = vmatprep.subr.mxu0 0.0
    %1006 = vmatpush1.msra.mxu0 0.0
    %1007 = vmatprep.subr.mxu0 0.0
    %1008 = vmatpush1.msra.mxu0 0.0
    %1009 = vmatprep.subr.mxu0 0.0
    %1010 = vmatpush1.msra.mxu0 0.0
    %1011 = vmatprep.subr.mxu0 0.0
    %1012 = vmatpush1.msra.mxu0 0.0
    %1013 = vmatprep.mubr.f32.mxu0 0.0
    %1014 = vmatmul.mubr.f32.gmra.mrb[0].mxu0 %v876
    %v1015 = vpop.f32.mrb[0].mxu0
    %v1016 = vadd.f32 0.0, %v1015
    %v1017 = vpop.f32.mrb[0].mxu0
    %v1018 = vadd.f32 0.0, %v1017
    %1019 = vdwg.mxu0
    %v1020 = vadd.f32 %v784, %v945
    %v1021 = vadd.f32 %v786, %v947
    %v1022 = vadd.f32 %v855, %v1016
    %v1023 = vadd.f32 %v857, %v1018
    %v1024 = vld [vmem:[%s12] sm:$0xf]
    %v1026 = vlaneseq
    %v1027 = vshrl.u32 %v1026, 7
    %v1028 = vsub.s32 0, %v1027
    %v1029 = vrot.slane %v1024, %v1028
    %v1030 = vlaneseq
    %v1031 = vshrl.u32 %v1030, 7
    %v1032 = vsub.s32 1, %v1031
    %v1033 = vrot.slane %v1024, %v1032
    %v1034 = vlaneseq
    %v1035 = vshrl.u32 %v1034, 7
    %v1036 = vsub.s32 2, %v1035
    %v1037 = vrot.slane %v1024, %v1036
    %v1038 = vlaneseq
    %v1039 = vshrl.u32 %v1038, 7
    %v1040 = vsub.s32 3, %v1039
    %v1041 = vrot.slane %v1024, %v1040
    %v1046 = vadd.f32 %v1020, %v1029
    %v1047 = vadd.f32 %v1021, %v1033
    %v1048 = vadd.f32 %v1022, %v1037
    %v1049 = vadd.f32 %v1023, %v1041
    %v1050 = vxor.u32 %v1046, 2147483648
    %v1051 = vmul.f32 %v1050, 1.442695
    %v1052 = vpow.pop %v1051
    %v1053 = vadd.f32 %v1052, 1.0
    %v1054 = vrcp.pop %v1053
    %v1055 = vmul.f32 1.0, %v1054
    %v1056 = vxor.u32 %v1047, 2147483648
    %v1057 = vmul.f32 %v1056, 1.442695
    %v1058 = vpow.pop %v1057
    %v1059 = vadd.f32 %v1058, 1.0
    %v1060 = vrcp.pop %v1059
    %v1061 = vmul.f32 1.0, %v1060
    %v1062 = vtanh.pop %v1048
    %v1063 = vxor.u32 %v1049, 2147483648
    %v1064 = vmul.f32 %v1063, 1.442695
    %v1065 = vpow.pop %v1064
    %v1066 = vadd.f32 %v1065, 1.0
    %v1067 = vrcp.pop %v1066
    %v1068 = vmul.f32 1.0, %v1067
    %v1069 = vmul.f32 %v1061, %v158
    %v1070 = vmul.f32 %v1055, %v1062
    %v1071 = vadd.f32 %v1069, %v1070
    %v1072 = vtanh.pop %v1071
    %v1073 = vmul.f32 %v1068, %v1072
    %v1074 = vld [vmem:[#allocation12] sm:$0xff]
    %v1075 = vld [vmem:[#allocation12 + $0x8] sm:$0xff]
    %v1076 = vld [vmem:[#allocation12 + $0x10] sm:$0xff]
    %v1077 = vld [vmem:[#allocation12 + $0x18] sm:$0xff]
    %v1078 = vld [vmem:[%s14] sm:$0x1]
    %v1080 = vlaneseq
    %v1081 = vshrl.u32 %v1080, 7
    %v1082 = vsub.s32 0, %v1081
    %v1083 = vrot.slane %v1078, %v1082
    %v1086 = vsel %vm165, %v1073, 0
    %1088 = vmatprep.subr.mxu0 0.0
    %1089 = vmatpush1.msra.mxu0 %v1074
    %1090 = vmatprep.subr.mxu0 0.0
    %1091 = vmatpush1.msra.mxu0 %v1075
    %1092 = vmatprep.subr.mxu0 0.0
    %1093 = vmatpush1.msra.mxu0 %v1076
    %1094 = vmatprep.subr.mxu0 0.0
    %1095 = vmatpush1.msra.mxu0 %v1077
    %1096 = vmatprep.subr.mxu0 0.0
    %1097 = vmatpush1.msra.mxu0 0.0
    %1098 = vmatprep.subr.mxu0 0.0
    %1099 = vmatpush1.msra.mxu0 0.0
    %1100 = vmatprep.subr.mxu0 0.0
    %1101 = vmatpush1.msra.mxu0 0.0
    %1102 = vmatprep.subr.mxu0 0.0
    %1103 = vmatpush1.msra.mxu0 0.0
    %1104 = vmatprep.subr.mxu0 0.0
    %1105 = vmatpush1.msra.mxu0 0.0
    %1106 = vmatprep.subr.mxu0 0.0
    %1107 = vmatpush1.msra.mxu0 0.0
    %1108 = vmatprep.subr.mxu0 0.0
    %1109 = vmatpush1.msra.mxu0 0.0
    %1110 = vmatprep.subr.mxu0 0.0
    %1111 = vmatpush1.msra.mxu0 0.0
    %1112 = vmatprep.subr.mxu0 0.0
    %1113 = vmatpush1.msra.mxu0 0.0
    %1114 = vmatprep.subr.mxu0 0.0
    %1115 = vmatpush1.msra.mxu0 0.0
    %1116 = vmatprep.subr.mxu0 0.0
    %1117 = vmatpush1.msra.mxu0 0.0
    %1118 = vmatprep.subr.mxu0 0.0
    %1119 = vmatpush1.msra.mxu0 0.0
    %1120 = vmatprep.subr.mxu0 0.0
    %1121 = vmatpush1.msra.mxu0 0.0
    %1122 = vmatprep.subr.mxu0 0.0
    %1123 = vmatpush1.msra.mxu0 0.0
    %1124 = vmatprep.subr.mxu0 0.0
    %1125 = vmatpush1.msra.mxu0 0.0
    %1126 = vmatprep.subr.mxu0 0.0
    %1127 = vmatpush1.msra.mxu0 0.0
    %1128 = vmatprep.subr.mxu0 0.0
    %1129 = vmatpush1.msra.mxu0 0.0
    %1130 = vmatprep.subr.mxu0 0.0
    %1131 = vmatpush1.msra.mxu0 0.0
    %1132 = vmatprep.subr.mxu0 0.0
    %1133 = vmatpush1.msra.mxu0 0.0
    %1134 = vmatprep.subr.mxu0 0.0
    %1135 = vmatpush1.msra.mxu0 0.0
    %1136 = vmatprep.subr.mxu0 0.0
    %1137 = vmatpush1.msra.mxu0 0.0
    %1138 = vmatprep.subr.mxu0 0.0
    %1139 = vmatpush1.msra.mxu0 0.0
    %1140 = vmatprep.subr.mxu0 0.0
    %1141 = vmatpush1.msra.mxu0 0.0
    %1142 = vmatprep.subr.mxu0 0.0
    %1143 = vmatpush1.msra.mxu0 0.0
    %1144 = vmatprep.subr.mxu0 0.0
    %1145 = vmatpush1.msra.mxu0 0.0
    %1146 = vmatprep.subr.mxu0 0.0
    %1147 = vmatpush1.msra.mxu0 0.0
    %1148 = vmatprep.subr.mxu0 0.0
    %1149 = vmatpush1.msra.mxu0 0.0
    %1150 = vmatprep.subr.mxu0 0.0
    %1151 = vmatpush1.msra.mxu0 0.0
    %1152 = vmatprep.mubr.f32.mxu0 0.0
    %1153 = vmatmul.mubr.f32.gmra.mrb[0].mxu0 %v1086
    %v1154 = vpop.f32.mrb[0].mxu0
    %v1155 = vadd.f32 %v1083, %v1154
    %v1156 = vpop.f32.mrb[0].mxu0
    %1157 = vdwg.mxu0
    %1158 = vst [vmem:[#allocation13] sm:$0x3] %v1155
    %vm1159 = vcmask 254976
    %1160 = vst.msk [vmem:[%s16] sm:$0x3] %vm1159, %v1073
    %1161 = vst.msk [vmem:[%s17] sm:$0x3] %vm1159, %v1071
    // Predicated region
    $region86: #{decoder_forward.1} parent=1 // pred_check
      _
    $region87: #{decoder_forward.1} parent=1 // pred_check_branch
      %1163 = sbr.rel (0) target = $region89
    $region88: #{decoder_forward.1} parent=1 // pred_region
      %s1165 = ssub.s32 32, 32
      %1166 = vsyncadd [#allocation4], %s1165
      %s1168 = sshll.u32 [#allocation13], 4
      %s1169 = int_to_ptr.vmem [resolvable:$true] %s1168
      %1171 = dma.vmem_to_hbm [thread:$0]  %s1169, 32, %s15, [#allocation4]
    $region89: #{decoder_forward.1} parent=1 // pred_fallthru
      _
    // Predicated region
    $region90: #{decoder_forward.1} parent=1 // pred_check
      _
    $region91: #{decoder_forward.1} parent=1 // pred_check_branch
      %1173 = sbr.rel (0) target = $region93
    $region92: #{decoder_forward.1} parent=1 // pred_region
      _
    $region93: #{decoder_forward.1} parent=1 // pred_fallthru
      _
    // Predicated region
    $region94: #{decoder_forward.1} parent=1 // pred_check
      _
    $region95: #{decoder_forward.1} parent=1 // pred_check_branch
      %1175 = sbr.rel (0) target = $region97
    $region96: #{decoder_forward.1} parent=1 // pred_region
      _
    $region97: #{decoder_forward.1} parent=1 // pred_fallthru
      _
    // Predicated region
    $region98: #{decoder_forward.1} parent=1 // pred_check
      _
    $region99: #{decoder_forward.1} parent=1 // pred_check_branch
      %1177 = sbr.rel (0) target = $region101
    $region100: #{decoder_forward.1} parent=1 // pred_region
      %1178 = dma.done [#allocation4], 32
    $region101: #{decoder_forward.1} parent=1 // pred_fallthru
      _
    // Predicated region
    $region102: #{decoder_forward.1} parent=1 // pred_check
      _
    $region103: #{decoder_forward.1} parent=1 // pred_check_branch
      %1180 = sbr.rel (0) target = $region105
    $region104: #{decoder_forward.1} parent=1 // pred_region
      _
    $region105: #{decoder_forward.1} parent=1 // pred_fallthru
      _
    // Predicated region
    $region106: #{decoder_forward.1} parent=1 // pred_check
      _
    $region107: #{decoder_forward.1} parent=1 // pred_check_branch
      %1182 = sbr.rel (0) target = $region109
    $region108: #{decoder_forward.1} parent=1 // pred_region
      _
    $region109: #{decoder_forward.1} parent=1 // pred_fallthru
      _
    %1183 = vsyncpa [#allocation3], 1
    %1184 = vsyncpa [#allocation8], 1
    %1185 = vsyncpa [#allocation11], 1
    %1186 = vsyncpa [#allocation4], 1
    %1187 = vsyncpa [#allocation5], 1

</llo_original>
